<compile_context>
chip_gen: v7x
topology: tpu7x:2x2x1
jax: 0.10.0
libtpu: 0.0.40
codegen_flags: <defaults>
</compile_context>

<pallas_src>
import jax
import jax.numpy as jnp
from jax.experimental import pallas as pl
from jax.experimental.pallas import tpu as pltpu

# Per-buffer VMEM budget for the (double-buffered) input block. 2 x 16 MiB of
# input buffers plus the tiny output fits every generation
# (v7x: 64 MiB physical, v5e/v6e: 128 MiB physical).
_INPUT_BUFFER_BUDGET_BYTES = 16 * 1024 * 1024
_VMEM_LIMIT_BYTES = 48 * 1024 * 1024


def _gap_kernel(x_ref, o_ref):
    # x_ref: (row_tile, HW) input block; o_ref: (1, row_tile) lane-dense output.
    x = x_ref[...].astype(jnp.float32)          # f32 accumulation (mandatory on v5e)
    inv_hw = jnp.float32(1.0 / x.shape[-1])     # true HW (block covers full width)
    row_mean = jnp.sum(x, axis=-1) * inv_hw     # (row_tile,) cross-lane reduce (XLU)
    o_ref[...] = row_mean[None, :].astype(o_ref.dtype)


def _derive_row_tile(bc: int, hw: int, itemsize: int) -> int:
    """Largest row tile whose double-buffered input block fits the VMEM budget."""
    padded_hw = pl.cdiv(hw, 128) * 128          # lane padding of the VMEM block
    bytes_per_row = padded_hw * itemsize
    rows = _INPUT_BUFFER_BUDGET_BYTES // max(1, bytes_per_row)
    # Sublane multiple: 8 for f32, 16 for bf16, 32 for int8.
    sub = 8 * max(1, 4 // itemsize)
    rows = max(sub, (rows // sub) * sub)
    rows = min(rows, pl.cdiv(bc, sub) * sub)    # don't tile beyond the data
    return rows


def global_avg_pool2d(x: jax.Array) -> jax.Array:
    """Equivalent of nn.functional.adaptive_avg_pool2d(x, 1).view(B, -1)."""
    B, C, H, W = x.shape
    BC, HW = B * C, H * W
    x2d = x.reshape(BC, HW)                     # contiguous view, free

    row_tile = _derive_row_tile(BC, HW, x.dtype.itemsize)
    n_row_blocks = pl.cdiv(BC, row_tile)
    # TODO(synk): for extremely large H*W (>~0.5M elements/row) add a second
    # "arbitrary" grid axis over HW with a VMEM scratch accumulator.

    out = pl.pallas_call(
        _gap_kernel,
        out_shape=jax.ShapeDtypeStruct((n_row_blocks, row_tile), x.dtype),
        grid_spec=pltpu.PrefetchScalarGridSpec(
            num_scalar_prefetch=0,
            grid=(n_row_blocks,),
            in_specs=[pl.BlockSpec((row_tile, HW), lambda i: (i, 0))],
            out_specs=pl.BlockSpec((1, row_tile), lambda i: (i, 0)),
        ),
        compiler_params=pltpu.CompilerParams(
            dimension_semantics=("parallel",),
            vmem_limit_bytes=_VMEM_LIMIT_BYTES,
        ),
    )(x2d)

    # Tail rows (index >= BC) of the last block are garbage; drop them here.
    return out.reshape(-1)[:BC].reshape(B, C)


if __name__ == "__main__":
    key = jax.random.PRNGKey(0)
    B, C, H, W = 2, 4, 16, 16
    x = jax.random.normal(key, (B, C, H, W), dtype=jnp.float32)

    y = global_avg_pool2d(x)
    jax.block_until_ready(y)

    # Reference check (plain JAX mean over spatial dims).
    y_ref = jnp.mean(x, axis=(2, 3))
    assert y.shape == (B, C), y.shape
    assert jnp.allclose(y, y_ref, atol=1e-5, rtol=1e-5)

    print("KERNEL_OK")
</pallas_src>

<mosaic_0001>
module attributes {stable_mosaic.version = 11 : i64} {
  func.func @_gap_kernel(%arg0: i32, %arg1: memref<8x256xf32, #tpu.memory_space<vmem>>, %arg2: memref<1x8xf32, #tpu.memory_space<vmem>>) attributes {dimension_semantics = [#tpu.dimension_semantics<parallel>], iteration_bounds = array<i64: 1>, scalar_prefetch = 0 : i64, scratch_operands = 0 : i64, tpu.core_type = #tpu.core_type<tc>, window_params = [{transform_indices = @transform_0, window_bounds = array<i64: 8, 256>}, {transform_indices = @transform_1, window_bounds = array<i64: 1, 8>}]} {
    %c0 = arith.constant 0 : index
    %c0_0 = arith.constant 0 : index
    %0 = vector.load %arg1[%c0, %c0_0] : memref<8x256xf32, #tpu.memory_space<vmem>>, vector<8x256xf32>
    %cst = arith.constant dense<0.000000e+00> : vector<8xf32>
    %1 = vector.multi_reduction <add>, %0, %cst [1] : vector<8x256xf32> to vector<8xf32>
    %cst_1 = arith.constant 3.906250e-03 : f32
    %2 = vector.broadcast %cst_1 : f32 to vector<8xf32>
    %3 = arith.mulf %1, %2 : vector<8xf32>
    %4 = vector.shape_cast %3 : vector<8xf32> to vector<1x8xf32>
    %c0_2 = arith.constant 0 : index
    %c0_3 = arith.constant 0 : index
    %5 = vector.load %arg2[%c0_2, %c0_3] : memref<1x8xf32, #tpu.memory_space<vmem>>, vector<1x8xf32>
    tpu.vector_store %arg2[%c0_2, %c0_3], %4 {strides = array<i32>} : memref<1x8xf32, #tpu.memory_space<vmem>>, vector<1x8xf32>,
    return
  }
  func.func @transform_0(%arg0: i32) -> (i32, i32) {
    %c0_i32 = arith.constant 0 : i32
    %c0_i32_0 = arith.constant 0 : i32
    return %arg0, %c0_i32 : i32, i32
  }
  func.func @transform_1(%arg0: i32) -> (i32, i32) {
    %c0_i32 = arith.constant 0 : i32
    %c0_i32_0 = arith.constant 0 : i32
    return %arg0, %c0_i32 : i32, i32
  }
}

</mosaic_0001>

<llo_original>
// kernel: tpu_custom_call.1
$region0: #{tpu_custom_call.1}
  #allocation0 [shape = 'u32[]', space=smem, size = 0x4, offset = 0x4, fixed_abs, tag = 'smem constant byte address 0x4 - core index']
  #allocation1 [shape = 'u32[144,128]{1,0:T(1,128)}', space=vmem, size = 0x12000, scoped, tag = 'internal scratch']
  %s0 = inlined_call_operand.hbm [shape: f32[8,256], index: 0, kind: input, shape index: {}]
  %s1 = inlined_call_operand.hbm [shape: f32[1,8], index: 1, kind: output, shape index: {}]
  %s2 = sld [smem:[#allocation0]]
  $region18: #{tpu_custom_call.1} parent=0
    _
  %s4 = ssub.s32 1, %s2
  %s5 = scalar_select 0, %s4, %s2
  $region1: #{tpu_custom_call.1} parent=0
    #allocation2 [shape = 'u8[8192]{0}', space=vmem, size = 0x2000, scoped, tag = 'input window, operand 0, single buffered']
    #allocation3 [shape = 's32[1]{0}', space=sflag, size = 0x4, scoped, tag = 'scoped memory for tpu_custom_call.1']
    #allocation4 [shape = 's32[1]{0}', space=sflag, size = 0x4, scoped, tag = 'scoped memory for tpu_custom_call.1']
    #allocation5 [shape = 'u8[512]{0}', space=vmem, size = 0x400, scoped, tag = 'output window, operand 0, single buffered']
    %6 = vsyncpa [#allocation3], 0
    %7 = vsyncpa [#allocation4], 0
    // Predicated region
    $region2: #{tpu_custom_call.1} parent=1 // pred_check
      _
    $region3: #{tpu_custom_call.1} parent=1 // pred_check_branch
      %9 = sbr.rel (0) target = $region5
    $region4: #{tpu_custom_call.1} parent=1 // pred_region
      %s11 = ssub.s32 256, 256
      %12 = vsyncadd [#allocation3], %s11
      %s14 = sshll.u32 [#allocation2], 4
      %s15 = int_to_ptr.vmem [resolvable:$true] %s14
      %17 = dma.hbm_to_vmem [thread:$0]  %s0, 256, %s15, [#allocation3]
    $region5: #{tpu_custom_call.1} parent=1 // pred_fallthru
      _
    // Predicated region
    $region6: #{tpu_custom_call.1} parent=1 // pred_check
      _
    $region7: #{tpu_custom_call.1} parent=1 // pred_check_branch
      %19 = sbr.rel (0) target = $region9
    $region8: #{tpu_custom_call.1} parent=1 // pred_region
      %20 = dma.done [#allocation3], 256
    $region9: #{tpu_custom_call.1} parent=1 // pred_fallthru
      _
    %v21 = vld [vmem:[#allocation2] sm:$0xff]
    %v22 = vld [vmem:[#allocation2 + $0x8] sm:$0xff]
    %v23 = vadd.f32 %v21, %v22
    %24 = vadd.xlane.f32.xlu0 %v23
    %v25 = vpop.xlane.xlu0 %24
    %v26 = vmul.f32 %v25, 0.00390625
    %v28 = vlaneseq
    %v29 = vand.u32 %v28, 127
    %v30 = vlaneseq
    %v31 = vshrl.u32 %v30, 7
    %v32 = vsub.s32 %v29, %v31
    %v33 = vrot.slane %v26, %v32
    %vm35 = vcmask 57344
    %36 = vst.msk [vmem:[#allocation5] sm:$0x1] %vm35, %v33
    // Predicated region
    $region10: #{tpu_custom_call.1} parent=1 // pred_check
      _
    $region11: #{tpu_custom_call.1} parent=1 // pred_check_branch
      %38 = sbr.rel (0) target = $region13
    $region12: #{tpu_custom_call.1} parent=1 // pred_region
      %s40 = ssub.s32 16, 16
      %41 = vsyncadd [#allocation4], %s40
      %s43 = sshll.u32 [#allocation5], 4
      %s44 = int_to_ptr.vmem [resolvable:$true] %s43
      %46 = dma.vmem_to_hbm [thread:$0]  %s44, 16, %s1, [#allocation4]
    $region13: #{tpu_custom_call.1} parent=1 // pred_fallthru
      _
    // Predicated region
    $region14: #{tpu_custom_call.1} parent=1 // pred_check
      _
    $region15: #{tpu_custom_call.1} parent=1 // pred_check_branch
      %48 = sbr.rel (0) target = $region17
    $region16: #{tpu_custom_call.1} parent=1 // pred_region
      %49 = dma.done [#allocation4], 16
    $region17: #{tpu_custom_call.1} parent=1 // pred_fallthru
      _
    %50 = vsyncpa [#allocation3], 1
    %51 = vsyncpa [#allocation4], 1

</llo_original>
